<compile_context>
chip_gen: v5e
topology: v5e:2x2
jax: 0.10.0
libtpu: 0.0.40
codegen_flags: <defaults>
</compile_context>

<pallas_src>
import functools

import jax
import jax.numpy as jnp
from jax import lax
from jax.experimental import pallas as pl
from jax.experimental.pallas import tpu as pltpu

MASK_VALUE = -jnp.finfo(jnp.float32).max
_CHUNK_POOLS = 128   # pools per de-interleave matmul (256 input lanes -> full MXU K)


def _attention_pool2_kernel(x_ref, wt_ref, s_ref, o_ref, *,
                            tile_pools, chunk_pools, chunk_lanes,
                            n_valid, zero_tail, mask_tail):
    """One (seq-tile, batch) grid step of pool_size==2 attention pooling.

    x_ref : (1, D, Lx)                   VMEM  raw interleaved sequence slab
    wt_ref: (D, D)                       VMEM  W^T (logits = W^T @ x), resident
    s_ref : (chunk_lanes, 2*chunk_pools) VMEM  de-interleave selector, resident
    o_ref : (1, D, tile_pools)           VMEM
    """
    ti = pl.program_id(0)
    x_t = x_ref[0]                                       # (D, Lx), native dtype

    if zero_tail:
        # Zero the out-of-bounds lanes of the (possibly partial) edge block so
        # unspecified DMA padding cannot reach a valid output column.  This also
        # reproduces the reference's zero-padding of the odd tail slot.  Cost is
        # ~1 select/elt, negligible next to the matmuls, so it is not gated to
        # the last tile only.
        pos = lax.broadcasted_iota(jnp.int32, (1, x_t.shape[-1]), 1)
        pos = pos + ti * (2 * tile_pools)
        x_t = jnp.where(pos >= n_valid, 0, x_t)

    # In-kernel de-interleave via the MXU: per 256-lane chunk, one matmul with a
    # constant 0/+-1 selector produces [x_even - x_odd | x_odd] (exact).
    sel_mat = s_ref[...]
    n_chunks = x_t.shape[-1] // chunk_lanes
    diffs, odds = [], []
    for c in range(n_chunks):                            # static, fully unrolled
        xk = x_t[:, c * chunk_lanes:(c + 1) * chunk_lanes]
        sel = jnp.dot(xk, sel_mat, preferred_element_type=x_t.dtype)
        diffs.append(sel[:, :chunk_pools])               # x_even - x_odd
        odds.append(sel[:, chunk_pools:])                # x_odd
    diff = diffs[0] if n_chunks == 1 else jnp.concatenate(diffs, axis=-1)
    x_o = odds[0] if n_chunks == 1 else jnp.concatenate(odds, axis=-1)

    # softmax over a pair == sigmoid of the logit difference, and the difference
    # needs only ONE logits matmul: l_e - l_o = W^T (x_e - x_o).
    delta = jnp.dot(wt_ref[...], diff, preferred_element_type=jnp.float32)
    p = 1.0 / (1.0 + jnp.exp(-delta))                    # stable for all finite delta

    if mask_tail:
        # Reference: the zero-padded odd slot of the last pool gets logit
        # -finfo.max -> its softmax weight is exactly 0, i.e. p_even == 1.
        pool_idx = lax.broadcasted_iota(jnp.int32, (1, tile_pools), 1)
        pool_idx = pool_idx + ti * tile_pools
        p = jnp.where(2 * pool_idx + 1 >= n_valid, 1.0, p)

    o_ref[0] = (x_o + p * diff).astype(o_ref.dtype)      # == p*x_e + (1-p)*x_o


def _vmem_capacity_bytes():
    try:
        return int(pltpu.get_tpu_info().vmem_capacity_bytes)
    except Exception:  # pragma: no cover - conservative (v7x-sized) fallback
        return 64 * 2**20


def _step_vmem_bytes(d, tile_pools, itemsize):
    x_blk = 2 * d * 2 * tile_pools * itemsize            # double-buffered input slab
    o_blk = 2 * d * tile_pools * itemsize                # double-buffered output tile
    w_blk = 2 * d * d * itemsize                         # resident W^T (default-buffered)
    s_blk = 2 * (2 * _CHUNK_POOLS) * (2 * _CHUNK_POOLS) * itemsize
    temps = d * tile_pools * (3 * itemsize + 12)         # diff/x_o/blend + f32 delta/p
    return x_blk + o_blk + w_blk + s_blk + temps


def _make_selector(in_lanes, out_pools, dtype):
    """(in_lanes, 2*out_pools): cols [0,P) -> x_even - x_odd, [P,2P) -> x_odd.

    Entries are 0/+-1 so the MXU de-interleave is exact in any dtype; a missing
    odd row (odd in_lanes) makes the zero-padded slot contribute exactly 0.
    """
    r = jnp.arange(in_lanes)[:, None]
    c = jnp.arange(out_pools)[None, :]
    even = (r == 2 * c).astype(dtype)
    odd = (r == 2 * c + 1).astype(dtype)
    return jnp.concatenate([even - odd, odd], axis=-1)


def attention_pool(x, w, pool_size=2, *, seq_tile_pools=512):
    """Pallas AttentionPool.forward.  x: (B, D, N), w: (D, D) (PyTorch layout)."""
    if pool_size != 2:
        # TODO(synk): pool_size != 2 falls back to pure JAX; the reference
        # module's padding rule is only well-formed for pool_size == 2.
        return attention_pool_ref(x, w, pool_size=pool_size)

    b, d, n = x.shape
    n_pools = (n + n % 2) // 2                 # == ceil(n/2), reference padding rule
    mask_tail = (n % 2) != 0
    wt = w.T                                   # logits = W^T @ x
    itemsize = jnp.dtype(x.dtype).itemsize

    vmem_cap = _vmem_capacity_bytes()
    vmem_limit = max(32 * 2**20, int(0.80 * vmem_cap))   # ~51 MiB v7x, ~102 MiB v5e/v6e
    tile_budget = int(0.6 * vmem_limit)

    if n_pools <= 128:
        # Single-tile path: whole problem in one block (full-extent block shapes
        # are legal for any D / any odd N).
        tile_pools = n_pools
        chunk_pools = n_pools
        chunk_lanes = n
        x_block_lanes = n
        zero_tail = False
        num_tiles = 1
    else:
        need = ((n_pools + 127) // 128) * 128
        allowed = min(max(128, int(seq_tile_pools)), need)
        tile_pools = 128
        for cand in (1024, 512, 256):
            if cand <= allowed and _step_vmem_bytes(d, cand, itemsize) <= tile_budget:
                tile_pools = cand
                break
        chunk_pools = _CHUNK_POOLS
        chunk_lanes = 2 * _CHUNK_POOLS
        x_block_lanes = 2 * tile_pools                  # multiple of 256 -> legal blocks
        num_tiles = (n_pools + tile_pools - 1) // tile_pools
        zero_tail = (n % x_block_lanes) != 0            # ragged edge block exists

    sel = _make_selector(chunk_lanes, chunk_pools, x.dtype)

    kernel = functools.partial(
        _attention_pool2_kernel,
        tile_pools=tile_pools, chunk_pools=chunk_pools, chunk_lanes=chunk_lanes,
        n_valid=n, zero_tail=zero_tail, mask_tail=mask_tail)

    return pl.pallas_call(
        kernel,
        out_shape=jax.ShapeDtypeStruct((b, d, n_pools), x.dtype),
        grid_spec=pltpu.PrefetchScalarGridSpec(
            num_scalar_prefetch=0,
            grid=(num_tiles, b),                        # seq tiles first: dominant megacore axis
            in_specs=[
                pl.BlockSpec((1, d, x_block_lanes), lambda ti, bi: (bi, 0, ti)),
                # W^T and the selector have constant block indices -> fetched once
                # and revisited.  (pipeline_mode=pl.Buffered(1) would also drop
                # their second VMEM buffer; left at the default for compatibility.)
                pl.BlockSpec((d, d), lambda ti, bi: (0, 0)),
                pl.BlockSpec((chunk_lanes, 2 * chunk_pools), lambda ti, bi: (0, 0)),
            ],
            out_specs=pl.BlockSpec((1, d, tile_pools), lambda ti, bi: (bi, 0, ti)),
        ),
        compiler_params=pltpu.CompilerParams(
            dimension_semantics=("parallel", "parallel"),
            vmem_limit_bytes=vmem_limit),
    )(x, wt, sel)


def attention_pool_ref(x, w, pool_size=2):
    """Pure-JAX mirror of the PyTorch forward (including its padding rule)."""
    b, d, n = x.shape
    remainder = n % pool_size
    needs_padding = remainder > 0
    if needs_padding:
        x = jnp.pad(x, ((0, 0), (0, 0), (0, remainder)))
        mask = jnp.concatenate(
            [jnp.zeros((b, 1, n), bool), jnp.ones((b, 1, remainder), bool)], axis=-1)
    logits = jnp.einsum('bdn,de->ben', x, w)
    xr = x.reshape(b, d, -1, pool_size)
    lr = logits.reshape(b, d, -1, pool_size)
    if needs_padding:
        mr = mask.reshape(b, 1, -1, pool_size)
        lr = jnp.where(mr, MASK_VALUE, lr)
    attn = jax.nn.softmax(lr, axis=-1)
    return (xr * attn).sum(-1)


if __name__ == "__main__":
    key = jax.random.PRNGKey(0)
    kw, kx1, kx2, kx3, kx4 = jax.random.split(key, 5)

    B, D, POOL = 2, 8, 2
    # __init__: nn.Parameter(torch.eye(dim)); perturb so the einsum path is exercised.
    w = jnp.eye(D, dtype=jnp.float32) + 0.05 * jax.random.normal(kw, (D, D), jnp.float32)

    def check(x, out):
        ref = attention_pool_ref(x, w, pool_size=POOL)
        assert out.shape == ref.shape, (out.shape, ref.shape)
        err = float(jnp.max(jnp.abs(out - ref)))
        assert jnp.allclose(out, ref, atol=1e-4, rtol=1e-4), err

    # 1) even length, single-tile path.
    x1 = jax.random.normal(kx1, (B, D, 16), dtype=jnp.float32)
    out1 = jax.block_until_ready(attention_pool(x1, w, pool_size=POOL))
    check(x1, out1)

    # 2) odd length -> in-kernel tail masking, single-tile path.
    x2 = jax.random.normal(kx2, (B, D, 15), dtype=jnp.float32)
    out2 = jax.block_until_ready(attention_pool(x2, w, pool_size=POOL))
    check(x2, out2)

    # 3) long even sequence -> multi-tile path with a ragged edge block.
    x3 = jax.random.normal(kx3, (B, D, 1000), dtype=jnp.float32)
    out3 = jax.block_until_ready(attention_pool(x3, w, pool_size=POOL, seq_tile_pools=128))
    check(x3, out3)

    # 4) long odd sequence -> ragged edge block + tail masking together.
    x4 = jax.random.normal(kx4, (B, D, 1001), dtype=jnp.float32)
    out4 = jax.block_until_ready(attention_pool(x4, w, pool_size=POOL, seq_tile_pools=128))
    check(x4, out4)

    print("KERNEL_OK")
</pallas_src>

<mosaic_0001>
module attributes {stable_mosaic.version = 11 : i64} {
  func.func @_attention_pool2_kernel(%arg0: i32, %arg1: i32, %arg2: memref<1x8x16xf32, #tpu.memory_space<vmem>>, %arg3: memref<8x8xf32, #tpu.memory_space<vmem>>, %arg4: memref<16x16xf32, #tpu.memory_space<vmem>>, %arg5: memref<1x8x8xf32, #tpu.memory_space<vmem>>) attributes {dimension_semantics = [#tpu.dimension_semantics<parallel>, #tpu.dimension_semantics<parallel>], iteration_bounds = array<i64: 1, 2>, scalar_prefetch = 0 : i64, scratch_operands = 0 : i64, tpu.core_type = #tpu.core_type<tc>, window_params = [{transform_indices = @transform_0, window_bounds = array<i64: 1, 8, 16>}, {pipeline_mode = #tpu.pipeline_mode<synchronous>, transform_indices = @transform_1, window_bounds = array<i64: 8, 8>}, {pipeline_mode = #tpu.pipeline_mode<synchronous>, transform_indices = @transform_2, window_bounds = array<i64: 16, 16>}, {transform_indices = @transform_3, window_bounds = array<i64: 1, 8, 8>}]} {
    %c0 = arith.constant 0 : index
    %c0_0 = arith.constant 0 : index
    %c0_1 = arith.constant 0 : index
    %0 = vector.load %arg2[%c0, %c0_0, %c0_1] : memref<1x8x16xf32, #tpu.memory_space<vmem>>, vector<1x8x16xf32>
    %1 = vector.shape_cast %0 : vector<1x8x16xf32> to vector<8x16xf32>
    %c0_2 = arith.constant 0 : index
    %c0_3 = arith.constant 0 : index
    %2 = vector.load %arg4[%c0_2, %c0_3] : memref<16x16xf32, #tpu.memory_space<vmem>>, vector<16x16xf32>
    %cst = arith.constant dense<0.000000e+00> : vector<8x16xf32>
    %3 = tpu.matmul %1, %2, %cst {dimension_numbers = #tpu.dot_dimension_numbers<[1], [0], [0], [1], [0, 0, 1, 1], [], []>} : vector<8x16xf32>, vector<16x16xf32>, vector<8x16xf32> -> vector<8x16xf32>
    %4 = vector.extract_strided_slice %3 {offsets = [0, 0], sizes = [8, 8], strides = [1, 1]} : vector<8x16xf32> to vector<8x8xf32>
    %5 = vector.extract_strided_slice %3 {offsets = [0, 8], sizes = [8, 8], strides = [1, 1]} : vector<8x16xf32> to vector<8x8xf32>
    %c0_4 = arith.constant 0 : index
    %c0_5 = arith.constant 0 : index
    %6 = vector.load %arg3[%c0_4, %c0_5] : memref<8x8xf32, #tpu.memory_space<vmem>>, vector<8x8xf32>
    %cst_6 = arith.constant dense<0.000000e+00> : vector<8x8xf32>
    %7 = tpu.matmul %6, %4, %cst_6 {dimension_numbers = #tpu.dot_dimension_numbers<[1], [0], [0], [1], [0, 0, 1, 1], [], []>} : vector<8x8xf32>, vector<8x8xf32>, vector<8x8xf32> -> vector<8x8xf32>
    %cst_7 = arith.constant 0.000000e+00 : f32
    %8 = vector.broadcast %cst_7 : f32 to vector<8x8xf32>
    %9 = arith.subf %8, %7 : vector<8x8xf32>
    %10 = math.exp %9 : vector<8x8xf32>
    %cst_8 = arith.constant 1.000000e+00 : f32
    %11 = vector.broadcast %cst_8 : f32 to vector<8x8xf32>
    %12 = arith.addf %11, %10 : vector<8x8xf32>
    %cst_9 = arith.constant 1.000000e+00 : f32
    %13 = vector.broadcast %cst_9 : f32 to vector<8x8xf32>
    %14 = arith.divf %13, %12 : vector<8x8xf32>
    %15 = arith.mulf %14, %4 : vector<8x8xf32>
    %16 = arith.addf %5, %15 : vector<8x8xf32>
    %c0_10 = arith.constant 0 : index
    %c0_11 = arith.constant 0 : index
    %c0_12 = arith.constant 0 : index
    %17 = vector.load %arg5[%c0_10, %c0_11, %c0_12] : memref<1x8x8xf32, #tpu.memory_space<vmem>>, vector<1x8x8xf32>
    %18 = vector.shape_cast %17 : vector<1x8x8xf32> to vector<8x8xf32>
    %19 = vector.shape_cast %16 : vector<8x8xf32> to vector<1x8x8xf32>
    tpu.vector_store %arg5[%c0_10, %c0_11, %c0_12], %19 {strides = array<i32>} : memref<1x8x8xf32, #tpu.memory_space<vmem>>, vector<1x8x8xf32>,
    return
  }
  func.func @transform_0(%arg0: i32, %arg1: i32) -> (i32, i32, i32) {
    %c0_i32 = arith.constant 0 : i32
    %c0_i32_0 = arith.constant 0 : i32
    return %arg1, %c0_i32, %arg0 : i32, i32, i32
  }
  func.func @transform_1(%arg0: i32, %arg1: i32) -> (i32, i32) {
    %c0_i32 = arith.constant 0 : i32
    %c0_i32_0 = arith.constant 0 : i32
    %c0_i32_1 = arith.constant 0 : i32
    return %c0_i32, %c0_i32_0 : i32, i32
  }
  func.func @transform_2(%arg0: i32, %arg1: i32) -> (i32, i32) {
    %c0_i32 = arith.constant 0 : i32
    %c0_i32_0 = arith.constant 0 : i32
    %c0_i32_1 = arith.constant 0 : i32
    return %c0_i32, %c0_i32_0 : i32, i32
  }
  func.func @transform_3(%arg0: i32, %arg1: i32) -> (i32, i32, i32) {
    %c0_i32 = arith.constant 0 : i32
    %c0_i32_0 = arith.constant 0 : i32
    return %arg1, %c0_i32, %arg0 : i32, i32, i32
  }
}

</mosaic_0001>

<llo_original>
// kernel: tpu_custom_call.1
$region0: #{tpu_custom_call.1}
  #allocation0 [shape = 'u32[]', space=smem, size = 0x4, offset = 0x4, fixed_abs, tag = 'smem constant byte address 0x4 - core index']
  #allocation1 [shape = 'u32[72,128]{1,0:T(1,128)}', space=vmem, size = 0x9000, scoped, tag = 'internal scratch']
  %s0 = inlined_call_operand.hbm [shape: f32[2,8,16], index: 0, kind: input, shape index: {}]
  %s1 = inlined_call_operand.hbm [shape: f32[8,8], index: 1, kind: input, shape index: {}]
  %s2 = inlined_call_operand.hbm [shape: f32[16,16], index: 2, kind: input, shape index: {}]
  %s3 = inlined_call_operand.hbm [shape: f32[2,8,8], index: 3, kind: output, shape index: {}]
  %s4 = sld [smem:[#allocation0]]
  $region57: #{tpu_custom_call.1} parent=0
    _
  %s6 = ssub.s32 1, %s4
  %s7 = scalar_select 0, %s6, %s4
  $region1: #{tpu_custom_call.1} parent=0
    #allocation2 [shape = 'u8[8192]{0}', space=vmem, size = 0x2000, scoped, tag = 'input window, operand 0']
    #allocation3 [shape = 's32[2]{0}', space=sflag, size = 0x8, scoped, tag = 'scoped memory for tpu_custom_call.1']
    #allocation4 [shape = 's32[2]{0}', space=sflag, size = 0x8, scoped, tag = 'scoped memory for tpu_custom_call.1']
    #allocation5 [shape = 'u8[4096]{0}', space=vmem, size = 0x1000, scoped, tag = 'input window, operand 1, single buffered']
    #allocation6 [shape = 's32[1]{0}', space=sflag, size = 0x4, scoped, tag = 'scoped memory for tpu_custom_call.1']
    #allocation7 [shape = 'u8[8192]{0}', space=vmem, size = 0x2000, scoped, tag = 'input window, operand 2, single buffered']
    #allocation8 [shape = 'u8[8192]{0}', space=vmem, size = 0x2000, scoped, tag = 'output window, operand 0']
    %8 = vsyncpa [#allocation3], 0
    %s9 = scalar_lea.sflag [#allocation3], 1
    %10 = vsyncpa %s9, 0
    %11 = vsyncpa [#allocation6], 0
    %12 = vsyncpa [#allocation4], 0
    %s13 = scalar_lea.sflag [#allocation4], 1
    %14 = vsyncpa %s13, 0
    loop: start=0, step=1, limit=4
    $region2: #{tpu_custom_call.1} parent=1 // loop_pre_header
      _
    $region3: #{tpu_custom_call.1} parent=1 // loop_header
      %s16 = sphi 0, %s20
      %p17 = scmp.ge.s32.totalorder %s16, 4
      %s23 = sphi 0, %s35
      %s24 = sphi 0, %s31
      %s25 = sphi 0, %s23
      %s26 = sphi 0, %s24
      %s27 = sphi 0, %s25
      %s28 = sphi 0, %s26
      %s40 = sphi 0, %s42
      %s43 = sphi 0, %s40
      %s44 = sphi 0, %s43
      %s60 = sphi 0, %s44
      %s64 = sphi 0, %s64
      %s66 = sphi 0, %s64
      %s67 = sphi 0, %s66
      %s81 = sphi 0, %s67
      %s85 = sphi 0, %s85
      %s87 = sphi 0, %s85
      %s88 = sphi 0, %s87
      %s102 = sphi 0, %s88
      %s110 = sphi 0, %s112
      %s113 = sphi 0, %s110
      %s114 = sphi 0, %s113
      %s130 = sphi 0, %s114
    $region4: #{tpu_custom_call.1} parent=1 // loop_header_branch
      %19 = sbr.rel (%p17) target = $region8
    $region5: #{tpu_custom_call.1} parent=1 // loop_body
      %s21 = ssub.s32 %s16, 1
      %s22 = ssub.s32 %s16, 2
      %s29 = sadd.s32 1, %s24
      %p30 = scmp.ge.s32.totalorder %s29, 2
      %s31 = scalar_select %p30, 0, %s29
      %s32 = sadd.s32 1, %s23
      %s33 = scalar_select %p30, %s32, %s23
      %p34 = scmp.ge.s32.totalorder %s33, 1
      %s35 = scalar_select %p34, 0, %s33
      %s36 = ssub.s32 %s24, %s31
      %s37 = ssub.s32 %s23, %s35
      %s38 = sor.u32 %s36, %s37
      %p39 = scmp.eq.s32.totalorder %s38, 0
      %s41 = sadd.s32 %s40, 1
      %s42 = scalar_select %p39, %s40, %s41
      %p45 = pneg %p39
      %p46 = scmp.eq.s32.totalorder %s16, 1
      %p47 = por %p45, %p46
      %p48 = scmp.ne.s32.totalorder %s40, %s43
      %p49 = scmp.eq.s32.totalorder %s16, 0
      %p50 = por %p48, %p49
      %p51 = scmp.ne.s32.totalorder %s40, %s43
      %p52 = scmp.eq.s32.totalorder %s21, 1
      %p53 = por %p51, %p52
      %p54 = scmp.ne.s32.totalorder %s43, %s44
      %p55 = scmp.eq.s32.totalorder %s21, 0
      %p56 = por %p54, %p55
      %p57 = scmp.ne.s32.totalorder %s43, %s44
      %p58 = scmp.eq.s32.totalorder %s22, 1
      %p59 = por %p57, %p58
      %p61 = scmp.ne.s32.totalorder %s44, %s60
      %p62 = scmp.eq.s32.totalorder %s22, 0
      %p63 = por %p61, %p62
      %s65 = sadd.s32 %s64, 1
      %p68 = scmp.eq.s32.totalorder %s16, 1
      %p69 = scmp.ne.s32.totalorder %s64, %s66
      %p70 = scmp.eq.s32.totalorder %s16, 0
      %p71 = por %p69, %p70
      %p72 = scmp.ne.s32.totalorder %s64, %s66
      %p73 = scmp.eq.s32.totalorder %s21, 1
      %p74 = por %p72, %p73
      %p75 = scmp.ne.s32.totalorder %s66, %s67
      %p76 = scmp.eq.s32.totalorder %s21, 0
      %p77 = por %p75, %p76
      %p78 = scmp.ne.s32.totalorder %s66, %s67
      %p79 = scmp.eq.s32.totalorder %s22, 1
      %p80 = por %p78, %p79
      %p82 = scmp.ne.s32.totalorder %s67, %s81
      %p83 = scmp.eq.s32.totalorder %s22, 0
      %p84 = por %p82, %p83
      %s86 = sadd.s32 %s85, 1
      %p89 = scmp.eq.s32.totalorder %s16, 1
      %p90 = scmp.ne.s32.totalorder %s85, %s87
      %p91 = scmp.eq.s32.totalorder %s16, 0
      %p92 = por %p90, %p91
      %p93 = scmp.ne.s32.totalorder %s85, %s87
      %p94 = scmp.eq.s32.totalorder %s21, 1
      %p95 = por %p93, %p94
      %p96 = scmp.ne.s32.totalorder %s87, %s88
      %p97 = scmp.eq.s32.totalorder %s21, 0
      %p98 = por %p96, %p97
      %p99 = scmp.ne.s32.totalorder %s87, %s88
      %p100 = scmp.eq.s32.totalorder %s22, 1
      %p101 = por %p99, %p100
      %p103 = scmp.ne.s32.totalorder %s88, %s102
      %p104 = scmp.eq.s32.totalorder %s22, 0
      %p105 = por %p103, %p104
      %s106 = ssub.s32 %s24, %s31
      %s107 = ssub.s32 %s23, %s35
      %s108 = sor.u32 %s106, %s107
      %p109 = scmp.eq.s32.totalorder %s108, 0
      %s111 = sadd.s32 %s110, 1
      %s112 = scalar_select %p109, %s110, %s111
      %p115 = pneg %p109
      %p116 = scmp.eq.s32.totalorder %s16, 1
      %p117 = por %p115, %p116
      %p118 = scmp.ne.s32.totalorder %s110, %s113
      %p119 = scmp.eq.s32.totalorder %s16, 0
      %p120 = por %p118, %p119
      %p121 = scmp.ne.s32.totalorder %s110, %s113
      %p122 = scmp.eq.s32.totalorder %s21, 1
      %p123 = por %p121, %p122
      %p124 = scmp.ne.s32.totalorder %s113, %s114
      %p125 = scmp.eq.s32.totalorder %s21, 0
      %p126 = por %p124, %p125
      %p127 = scmp.ne.s32.totalorder %s113, %s114
      %p128 = scmp.eq.s32.totalorder %s22, 1
      %p129 = por %p127, %p128
      %p131 = scmp.ne.s32.totalorder %s114, %s130
      %p132 = scmp.eq.s32.totalorder %s22, 0
      %p133 = por %p131, %p132
      %p134 = scmp.le.s32.totalorder 1, %s16
      %p135 = scmp.lt.s32.totalorder %s16, 3
      %p136 = pnand %p134, %p135
      %p137 = pneg %p136
      // Predicated region
      $region9: #{tpu_custom_call.1} parent=5 // pred_check
        _
      $region10: #{tpu_custom_call.1} parent=5 // pred_check_branch
        %139 = sbr.rel (%p136) target = $region12
      $region11: #{tpu_custom_call.1} parent=5 // pred_region
        %s140 = ssub.s32 %s16, 1
        // Predicated region
        $region13: #{tpu_custom_call.1} parent=11 // pred_check
          %p141 = pneg %p77
        $region14: #{tpu_custom_call.1} parent=11 // pred_check_branch
          %143 = sbr.rel (%p141) target = $region16
        $region15: #{tpu_custom_call.1} parent=11 // pred_region
          %145 = vsyncadd [#allocation6], 0
          %s147 = sshll.u32 %s1, 4
          %s148 = int_to_ptr.hbm [resolvable:$true] %s147
          %s149 = sshll.u32 [#allocation5], 4
          %s150 = int_to_ptr.vmem [resolvable:$true] %s149
          %152 = dma.hbm_to_vmem [thread:$0]  %s148, 128, %s150, [#allocation6]
        $region16: #{tpu_custom_call.1} parent=11 // pred_fallthru
          _
        // Predicated region
        $region17: #{tpu_custom_call.1} parent=11 // pred_check
          %p153 = pneg %p98
        $region18: #{tpu_custom_call.1} parent=11 // pred_check_branch
          %155 = sbr.rel (%p153) target = $region20
        $region19: #{tpu_custom_call.1} parent=11 // pred_region
          %157 = vsyncadd [#allocation6], 0
          %s158 = sshll.u32 %s2, 4
          %s159 = int_to_ptr.hbm [resolvable:$true] %s158
          %s160 = sshll.u32 [#allocation7], 4
          %s161 = int_to_ptr.vmem [resolvable:$true] %s160
          %166 = dma.hbm_to_vmem [thread:$0]  %s159, 256, %s161, [#allocation6], 128, 128, 8
        $region20: #{tpu_custom_call.1} parent=11 // pred_fallthru
          _
      $region12: #{tpu_custom_call.1} parent=5 // pred_fallthru
        _
      %p167 = scmp.lt.s32.totalorder %s16, 2
      // Predicated region
      $region21: #{tpu_custom_call.1} parent=5 // pred_check
        %p168 = pneg %p167
      $region22: #{tpu_custom_call.1} parent=5 // pred_check_branch
        %170 = sbr.rel (%p168) target = $region24
      $region23: #{tpu_custom_call.1} parent=5 // pred_region
        // Predicated region
        $region25: #{tpu_custom_call.1} parent=23 // pred_check
          %p171 = pneg %p50
        $region26: #{tpu_custom_call.1} parent=23 // pred_check_branch
          %173 = sbr.rel (%p171) target = $region28
        $region27: #{tpu_custom_call.1} parent=23 // pred_region
          %s174 = sand.u32 %s40, 1
          %s175 = scalar_lea.sflag [#allocation3], %s174
          %s176 = sand.u32 %s40, 1
          %s177 = smul.addr %s176, 8
          %s178 = scalar_lea.vmem [#allocation2], %s177
          %180 = vsyncadd %s175, 0
          %s181 = sadd.s32 %s23, %s24
          %s182 = smul.addr %s181, 8
          %s183 = scalar_lea.hbm %s0, %s182
          %s185 = sshll.u32 %s183, 4
          %s186 = int_to_ptr.hbm [resolvable:$true] %s185
          %s187 = sshll.u32 %s178, 4
          %s188 = int_to_ptr.vmem [resolvable:$true] %s187
          %190 = dma.hbm_to_vmem [thread:$0]  %s186, 128, %s188, %s175
        $region28: #{tpu_custom_call.1} parent=23 // pred_fallthru
          _
      $region24: #{tpu_custom_call.1} parent=5 // pred_fallthru
        _
      %p191 = scmp.le.s32.totalorder 1, %s16
      %p192 = scmp.lt.s32.totalorder %s16, 3
      %p193 = pnand %p191, %p192
      %p194 = pneg %p193
      // Predicated region
      $region29: #{tpu_custom_call.1} parent=5 // pred_check
        _
      $region30: #{tpu_custom_call.1} parent=5 // pred_check_branch
        %196 = sbr.rel (%p193) target = $region32
      $region31: #{tpu_custom_call.1} parent=5 // pred_region
        %s197 = ssub.s32 %s16, 1
        %s198 = sand.u32 %s43, 1
        %s199 = scalar_lea.sflag [#allocation3], %s198
        %s200 = sand.u32 %s43, 1
        %s201 = smul.addr %s200, 8
        %s202 = scalar_lea.vmem [#allocation2], %s201
        // Predicated region
        $region33: #{tpu_custom_call.1} parent=31 // pred_check
          %p203 = pneg %p56
        $region34: #{tpu_custom_call.1} parent=31 // pred_check_branch
          %205 = sbr.rel (%p203) target = $region36
        $region35: #{tpu_custom_call.1} parent=31 // pred_region
          %207 = dma.done %s199, 128
        $region36: #{tpu_custom_call.1} parent=31 // pred_fallthru
          _
        // Predicated region
        $region37: #{tpu_custom_call.1} parent=31 // pred_check
          %p208 = pneg %p77
        $region38: #{tpu_custom_call.1} parent=31 // pred_check_branch
          %210 = sbr.rel (%p208) target = $region40
        $region39: #{tpu_custom_call.1} parent=31 // pred_region
          %212 = dma.done [#allocation6], 128
        $region40: #{tpu_custom_call.1} parent=31 // pred_fallthru
          _
        // Predicated region
        $region41: #{tpu_custom_call.1} parent=31 // pred_check
          %p213 = pneg %p98
        $region42: #{tpu_custom_call.1} parent=31 // pred_check_branch
          %215 = sbr.rel (%p213) target = $region44
        $region43: #{tpu_custom_call.1} parent=31 // pred_region
          %217 = dma.done [#allocation6], 256
        $region44: #{tpu_custom_call.1} parent=31 // pred_fallthru
          _
        %s218 = sand.u32 %s43, 1
        %s219 = scalar_lea.sflag [#allocation3], %s218
        %s220 = sand.u32 %s43, 1
        %s221 = smul.addr %s220, 8
        %s222 = scalar_lea.vmem [#allocation2], %s221
        %p223 = pneg %p56
        %p224 = pneg %p53
        %p225 = pneg %p77
        %p226 = pneg %p74
        %p227 = pneg %p98
        %p228 = pneg %p95
        %p229 = pneg %p126
        %p230 = pneg %p123
        %s231 = sand.u32 %s113, 1
        %s232 = scalar_lea.sflag [#allocation4], %s231
        %s233 = sand.u32 %s113, 1
        %s234 = smul.addr %s233, 8
        %s235 = scalar_lea.vmem [#allocation8], %s234
        %v236 = vld [vmem:[%s202] sm:$0xff]
        %v237 = vld [vmem:[#allocation7] sm:$0xff]
        %v238 = vld [vmem:[#allocation7 + $0x8] sm:$0xff]
        %vm239 = vcmask 130048
        %v241 = vsel %vm239, %v236, 0
        %243 = vmatpush.msra.mxu0 0.0
        %244 = vmatpush.msra.mxu0 0.0
        %245 = vmatpush.msra.mxu0 0.0
        %246 = vmatpush.msra.mxu0 0.0
        %247 = vmatpush.msra.mxu0 0.0
        %248 = vmatpush.msra.mxu0 0.0
        %249 = vmatpush.msra.mxu0 0.0
        %250 = vmatpush.msra.mxu0 0.0
        %251 = vmatpush.msra.mxu0 0.0
        %252 = vmatpush.msra.mxu0 0.0
        %253 = vmatpush.msra.mxu0 0.0
        %254 = vmatpush.msra.mxu0 0.0
        %255 = vmatpush.msra.mxu0 0.0
        %256 = vmatpush.msra.mxu0 0.0
        %257 = vmatpush.msra.mxu0 %v238
        %258 = vmatpush.msra.mxu0 %v237
        %259 = vmatmul.f32.gmra.mxu0 %v241
        %v260 = vpop.f32.mrf.mxu0
        %v261 = vadd.f32 0.0, %v260
        %262 = vdwg.mxu0
        %v263 = vld [vmem:[#allocation5] sm:$0xff]
        %vm264 = vcmask 64512
        %v266 = vsel %vm264, %v263, 0
        %268 = vmatpush.msra.mxu0 0.0
        %269 = vmatpush.msra.mxu0 0.0
        %270 = vmatpush.msra.mxu0 0.0
        %271 = vmatpush.msra.mxu0 0.0
        %272 = vmatpush.msra.mxu0 0.0
        %273 = vmatpush.msra.mxu0 0.0
        %274 = vmatpush.msra.mxu0 0.0
        %275 = vmatpush.msra.mxu0 0.0
        %276 = vmatpush.msra.mxu0 0.0
        %277 = vmatpush.msra.mxu0 0.0
        %278 = vmatpush.msra.mxu0 0.0
        %279 = vmatpush.msra.mxu0 0.0
        %280 = vmatpush.msra.mxu0 0.0
        %281 = vmatpush.msra.mxu0 0.0
        %282 = vmatpush.msra.mxu0 0.0
        %283 = vmatpush.msra.mxu0 %v261
        %284 = vmatmul.f32.gmra.mxu0 %v266
        %v285 = vpop.f32.mrf.mxu0
        %v286 = vadd.f32 0.0, %v285
        %287 = vdwg.mxu0
        %v288 = vsub.f32 0.0, %v286
        %v289 = vmul.f32 %v288, 1.442695
        %v290 = vpow.pop %v289
        %v291 = vadd.f32 %v290, 1.0
        %v292 = vrcp.pop %v291
        %v293 = vmul.f32 %v291, %v292
        %v294 = vsub.f32 1.0, %v293
        %v295 = vmul.f32 %v292, %v294
        %v296 = vadd.f32 %v292, %v295
        %vm297 = vweird.f32 %v291
        %vm298 = vweird.f32 %v292
        %vm299 = vmor %vm297, %vm298
        %v300 = vsel %vm299, %v292, %v296
        %v301 = vand.u32 2147483647, %v291
        %vm302 = vcmp.eq.f32.partialorder %v301, 8.507059e+37
        %v303 = vand.u32 %v291, 2147483648
        %v304 = vor.u32 1.1754944e-38, %v303
        %v305 = vsel %vm302, %v304, %v300
        %v306 = vmul.f32 1.0, %v305
        %v307 = vmul.f32 %v306, %v261
        %309 = vrot.lane.b32.xlu0 %v307, 8
        %v310 = vpop.permute.xlu0 %309
        %v312 = vadd.f32 %v261, %v310
        %314 = vrot.lane.b32.xlu0 %v312, 120
        %v315 = vpop.permute.xlu0 %314
        %317 = vst.msk [vmem:[%s235] sm:$0xff] %vm264, %v315
        %s318 = sand.u32 %s113, 1
        %s319 = scalar_lea.sflag [#allocation4], %s318
        %s320 = sand.u32 %s113, 1
        %s321 = smul.addr %s320, 8
        %s322 = scalar_lea.vmem [#allocation8], %s321
        // Predicated region
        $region45: #{tpu_custom_call.1} parent=31 // pred_check
          %p323 = pneg %p123
        $region46: #{tpu_custom_call.1} parent=31 // pred_check_branch
          %325 = sbr.rel (%p323) target = $region48
        $region47: #{tpu_custom_call.1} parent=31 // pred_region
          %327 = vsyncadd %s319, 0
          %s328 = sadd.s32 %s25, %s26
          %s329 = smul.addr %s328, 8
          %s330 = scalar_lea.hbm %s3, %s329
          %s332 = sshll.u32 %s322, 4
          %s333 = int_to_ptr.vmem [resolvable:$true] %s332
          %s334 = sshll.u32 %s330, 4
          %s335 = int_to_ptr.hbm [resolvable:$true] %s334
          %337 = dma.vmem_to_hbm [thread:$0]  %s333, 128, %s335, %s319
        $region48: #{tpu_custom_call.1} parent=31 // pred_fallthru
          _
      $region32: #{tpu_custom_call.1} parent=5 // pred_fallthru
        _
      %p338 = scmp.le.s32.totalorder 2, %s16
      // Predicated region
      $region49: #{tpu_custom_call.1} parent=5 // pred_check
        %p339 = pneg %p338
      $region50: #{tpu_custom_call.1} parent=5 // pred_check_branch
        %341 = sbr.rel (%p339) target = $region52
      $region51: #{tpu_custom_call.1} parent=5 // pred_region
        %s342 = ssub.s32 %s16, 2
        // Predicated region
        $region53: #{tpu_custom_call.1} parent=51 // pred_check
          %p343 = pneg %p129
        $region54: #{tpu_custom_call.1} parent=51 // pred_check_branch
          %345 = sbr.rel (%p343) target = $region56
        $region55: #{tpu_custom_call.1} parent=51 // pred_region
          %s346 = sand.u32 %s114, 1
          %s347 = scalar_lea.sflag [#allocation4], %s346
          %s348 = sand.u32 %s114, 1
          %s349 = smul.addr %s348, 8
          %s350 = scalar_lea.vmem [#allocation8], %s349
          %352 = dma.done %s347, 128
        $region56: #{tpu_custom_call.1} parent=51 // pred_fallthru
          _
      $region52: #{tpu_custom_call.1} parent=5 // pred_fallthru
        _
    $region6: #{tpu_custom_call.1} parent=1 // loop_footer
      %s20 = sadd.s32 1, %s16
    $region7: #{tpu_custom_call.1} parent=1 // loop_footer_branch
      %15 = sbr.rel target = $region3
    $region8: #{tpu_custom_call.1} parent=1 // loop_exit
      _
    %353 = vsyncpa [#allocation3], 1
    %s354 = scalar_lea.sflag [#allocation3], 1
    %355 = vsyncpa %s354, 1
    %356 = vsyncpa [#allocation6], 1
    %357 = vsyncpa [#allocation4], 1
    %s358 = scalar_lea.sflag [#allocation4], 1
    %359 = vsyncpa %s358, 1

</llo_original>
